<compile_context>
chip_gen: v5e
topology: v5e:2x2
jax: 0.10.0
libtpu: 0.0.40
codegen_flags: <defaults>
</compile_context>

<pallas_src>
from functools import partial

import numpy as np
import jax
import jax.numpy as jnp
from jax.experimental import pallas as pl
from jax.experimental.pallas import tpu as pltpu


# ----------------------------------------------------------------------------
# Parameter setup (deterministic, in-script): DPSS (Slepian) tapers
# ----------------------------------------------------------------------------
def calculate_num_tapers(n_fft, sample_rate, frequency_resolution):
    window_size_seconds = n_fft / sample_rate
    thbp = max(window_size_seconds * frequency_resolution, 1)
    num_tapers = int(2 * thbp - 1)
    return int(thbp), num_tapers


def dpss_windows(M, NW, Kmax):
    """Discrete prolate spheroidal sequences (unit L2 norm), classic
    tridiagonal eigenproblem (same construction scipy.signal.windows.dpss)."""
    n = np.arange(M, dtype=np.float64)
    W = NW / M
    diag = ((M - 1 - 2.0 * n) / 2.0) ** 2 * np.cos(2.0 * np.pi * W)
    off = n[1:] * (M - n[1:]) / 2.0
    A = np.diag(diag) + np.diag(off, 1) + np.diag(off, -1)
    _, v = np.linalg.eigh(A)
    wins = np.ascontiguousarray(v[:, ::-1][:, :Kmax].T)  # [Kmax, M], unit norm
    for k in range(Kmax):
        if k % 2 == 0:
            if wins[k].sum() < 0:
                wins[k] *= -1.0
        else:
            idx = int(np.argmax(np.abs(wins[k]) > 1e-7))
            if wins[k, idx] < 0:
                wins[k] *= -1.0
    return wins


def _round_up(x, m):
    return ((x + m - 1) // m) * m


# ----------------------------------------------------------------------------
# Pallas kernel: one MXU matmul per row tile, in-register |.|^2 + taper mean
# ----------------------------------------------------------------------------
def _mts_kernel(frames_ref, w_ref, o_ref, *, n_freq_pad, num_tapers):
    f = frames_ref[...]                                   # [tm, n_fft]   bf16
    w = w_ref[...]                                        # [n_fft, 2K*Fp] bf16
    p = jnp.dot(f, w, preferred_element_type=jnp.float32)  # [tm, 2K*Fp]  f32
    acc = None
    for j in range(2 * num_tapers):                       # static, lane-aligned slices
        s = p[:, j * n_freq_pad:(j + 1) * n_freq_pad]
        sq = s * s                                        # re^2 or im^2
        acc = sq if acc is None else acc + sq
    o_ref[...] = (acc * (1.0 / num_tapers)).astype(o_ref.dtype)


def multitaper_spectrogram(x, *, sample_rate, n_fft, frequency_resolution=1.0):
    """x: (B, C, T) float -> (B, C, n_freq, n_frames) float32.
    Matches torchaudio Spectrogram defaults: win_length=n_fft, hop=n_fft//2,
    pad=0, power=2, normalized=False, center=True, reflect pad, onesided."""
    tbw, num_tapers = calculate_num_tapers(n_fft, sample_rate, frequency_resolution)
    hop = n_fft // 2
    n_freq = n_fft // 2 + 1
    n_freq_pad = _round_up(n_freq, 128)                   # lane-dense output

    B, C, T = x.shape
    pad = n_fft // 2
    assert T > pad, "reflect padding requires T > n_fft // 2"
    n_frames = T // hop + 1                               # center=True, pad=0

    # Fused, lane-dense DFT basis: [n_fft, 2*K*n_freq_pad] (bf16, VMEM resident)
    tapers = dpss_windows(n_fft, tbw, num_tapers)         # [K, n_fft]
    ang = 2.0 * np.pi * np.arange(n_fft)[:, None] * np.arange(n_freq)[None, :] / n_fft
    cosm = np.cos(ang)
    sinm = -np.sin(ang)
    w = np.zeros((n_fft, 2 * num_tapers, n_freq_pad), dtype=np.float32)
    for k in range(num_tapers):
        w[:, 2 * k, :n_freq] = tapers[k][:, None] * cosm
        w[:, 2 * k + 1, :n_freq] = tapers[k][:, None] * sinm
    Nw = 2 * num_tapers * n_freq_pad
    w = jnp.asarray(w.reshape(n_fft, Nw), dtype=jnp.bfloat16)

    # Glue: center/reflect pad + frame -> flat [B*C*n_frames, n_fft] rows.
    # TODO(synk): build frames in-kernel from hop-sized chunks (50% overlap) of
    # the padded signal via memory_space=pl.ANY DMA to avoid materializing the
    # ~2x-sized framed tensor in HBM.
    xp = jnp.pad(x, ((0, 0), (0, 0), (pad, pad)), mode="reflect")
    gather_idx = np.arange(n_frames)[:, None] * hop + np.arange(n_fft)[None, :]
    frames = xp[:, :, gather_idx].reshape(B * C * n_frames, n_fft)

    M_total = B * C * n_frames
    tm = min(256, _round_up(M_total, 8))                  # MXU-friendly row tile
    M_pad = _round_up(M_total, tm)
    if M_pad > M_total:
        frames = jnp.pad(frames, ((0, M_pad - M_total), (0, 0)))
    frames = frames.astype(jnp.bfloat16)

    # Scoped-VMEM budget sized from the actual blocks (keeps v7x's 64 MiB happy).
    est = (2 * tm * n_fft * 2            # frames, double buffered, bf16
           + 2 * n_fft * Nw * 2          # basis (constant block), bf16
           + 2 * tm * n_freq_pad * 4     # output, double buffered, f32
           + tm * Nw * 4                 # matmul result live value, f32
           + tm * n_freq_pad * 4)        # accumulator, f32
    vmem_limit = int(min(max(2 * est, 16 * 1024 * 1024), 64 * 1024 * 1024))

    kernel = partial(_mts_kernel, n_freq_pad=n_freq_pad, num_tapers=num_tapers)
    out = pl.pallas_call(
        kernel,
        out_shape=jax.ShapeDtypeStruct((M_pad, n_freq_pad), jnp.float32),
        grid_spec=pltpu.PrefetchScalarGridSpec(
            num_scalar_prefetch=0,
            grid=(M_pad // tm,),
            in_specs=[
                pl.BlockSpec((tm, n_fft), lambda m: (m, 0)),
                pl.BlockSpec((n_fft, Nw), lambda m: (0, 0)),   # resident basis
            ],
            out_specs=pl.BlockSpec((tm, n_freq_pad), lambda m: (m, 0)),
        ),
        compiler_params=pltpu.CompilerParams(
            dimension_semantics=("parallel",),
            vmem_limit_bytes=vmem_limit),
    )(frames, w)

    out = out[:M_total, :n_freq].reshape(B, C, n_frames, n_freq)
    # TODO(synk): fold this transpose into the kernel's output layout to avoid
    # an extra HBM round trip of the output.
    return jnp.swapaxes(out, -1, -2)                      # (B, C, n_freq, n_frames)


# ----------------------------------------------------------------------------
# Pure-JAX reference (same math via rfft, f32) for a sanity check
# ----------------------------------------------------------------------------
def _reference(x, *, sample_rate, n_fft, frequency_resolution=1.0):
    tbw, num_tapers = calculate_num_tapers(n_fft, sample_rate, frequency_resolution)
    hop = n_fft // 2
    B, C, T = x.shape
    n_frames = T // hop + 1
    tapers = jnp.asarray(dpss_windows(n_fft, tbw, num_tapers), dtype=jnp.float32)
    pad = n_fft // 2
    xp = jnp.pad(x, ((0, 0), (0, 0), (pad, pad)), mode="reflect")
    gather_idx = np.arange(n_frames)[:, None] * hop + np.arange(n_fft)[None, :]
    frames = xp[:, :, gather_idx]                         # [B, C, n_frames, n_fft]
    acc = jnp.zeros((B, C, n_frames, n_fft // 2 + 1), jnp.float32)
    for k in range(num_tapers):
        spec = jnp.fft.rfft(frames * tapers[k], axis=-1)
        acc = acc + jnp.abs(spec).astype(jnp.float32) ** 2
    return jnp.swapaxes(acc / num_tapers, -1, -2)


if __name__ == "__main__":
    # Small shapes: sample_rate=8, n_fft=16 -> time_bandwidth=2, num_tapers=3,
    # n_freq=9 (padded to 128 in-kernel), hop=8; T=64 -> n_frames=9.
    sample_rate, n_fft = 8, 16
    key = jax.random.PRNGKey(0)
    x = jax.random.normal(key, (2, 4, 64), dtype=jnp.float32)

    out = multitaper_spectrogram(x, sample_rate=sample_rate, n_fft=n_fft)
    out = jax.block_until_ready(out)

    ref = _reference(x, sample_rate=sample_rate, n_fft=n_fft)
    # Tolerance accounts for bf16 MXU inputs vs the f32 rfft reference.
    np.testing.assert_allclose(np.asarray(out), np.asarray(ref), rtol=5e-2, atol=5e-2)
    assert out.shape == (2, 4, n_fft // 2 + 1, 64 // (n_fft // 2) + 1)

    print("KERNEL_OK")
</pallas_src>

<mosaic_0001>
module attributes {stable_mosaic.version = 11 : i64} {
  func.func @_mts_kernel(%arg0: i32, %arg1: memref<72x16xbf16, #tpu.memory_space<vmem>>, %arg2: memref<16x768xbf16, #tpu.memory_space<vmem>>, %arg3: memref<72x128xf32, #tpu.memory_space<vmem>>) attributes {dimension_semantics = [#tpu.dimension_semantics<parallel>], iteration_bounds = array<i64: 1>, scalar_prefetch = 0 : i64, scratch_operands = 0 : i64, tpu.core_type = #tpu.core_type<tc>, window_params = [{transform_indices = @transform_0, window_bounds = array<i64: 72, 16>}, {pipeline_mode = #tpu.pipeline_mode<synchronous>, transform_indices = @transform_1, window_bounds = array<i64: 16, 768>}, {transform_indices = @transform_2, window_bounds = array<i64: 72, 128>}]} {
    %c0 = arith.constant 0 : index
    %c0_0 = arith.constant 0 : index
    %0 = vector.load %arg1[%c0, %c0_0] : memref<72x16xbf16, #tpu.memory_space<vmem>>, vector<72x16xbf16>
    %c0_1 = arith.constant 0 : index
    %c0_2 = arith.constant 0 : index
    %1 = vector.load %arg2[%c0_1, %c0_2] : memref<16x768xbf16, #tpu.memory_space<vmem>>, vector<16x768xbf16>
    %cst = arith.constant dense<0.000000e+00> : vector<72x768xf32>
    %2 = tpu.matmul %0, %1, %cst {dimension_numbers = #tpu.dot_dimension_numbers<[1], [0], [0], [1], [0, 0, 1, 1], [], []>} : vector<72x16xbf16>, vector<16x768xbf16>, vector<72x768xf32> -> vector<72x768xf32>
    %3 = vector.extract_strided_slice %2 {offsets = [0, 0], sizes = [72, 128], strides = [1, 1]} : vector<72x768xf32> to vector<72x128xf32>
    %4 = arith.mulf %3, %3 : vector<72x128xf32>
    %5 = vector.extract_strided_slice %2 {offsets = [0, 128], sizes = [72, 128], strides = [1, 1]} : vector<72x768xf32> to vector<72x128xf32>
    %6 = arith.mulf %5, %5 : vector<72x128xf32>
    %7 = arith.addf %4, %6 : vector<72x128xf32>
    %8 = vector.extract_strided_slice %2 {offsets = [0, 256], sizes = [72, 128], strides = [1, 1]} : vector<72x768xf32> to vector<72x128xf32>
    %9 = arith.mulf %8, %8 : vector<72x128xf32>
    %10 = arith.addf %7, %9 : vector<72x128xf32>
    %11 = vector.extract_strided_slice %2 {offsets = [0, 384], sizes = [72, 128], strides = [1, 1]} : vector<72x768xf32> to vector<72x128xf32>
    %12 = arith.mulf %11, %11 : vector<72x128xf32>
    %13 = arith.addf %10, %12 : vector<72x128xf32>
    %14 = vector.extract_strided_slice %2 {offsets = [0, 512], sizes = [72, 128], strides = [1, 1]} : vector<72x768xf32> to vector<72x128xf32>
    %15 = arith.mulf %14, %14 : vector<72x128xf32>
    %16 = arith.addf %13, %15 : vector<72x128xf32>
    %17 = vector.extract_strided_slice %2 {offsets = [0, 640], sizes = [72, 128], strides = [1, 1]} : vector<72x768xf32> to vector<72x128xf32>
    %18 = arith.mulf %17, %17 : vector<72x128xf32>
    %19 = arith.addf %16, %18 : vector<72x128xf32>
    %cst_3 = arith.constant 0.333333343 : f32
    %20 = vector.broadcast %cst_3 : f32 to vector<72x128xf32>
    %21 = arith.mulf %19, %20 : vector<72x128xf32>
    %c0_4 = arith.constant 0 : index
    %c0_5 = arith.constant 0 : index
    %22 = vector.load %arg3[%c0_4, %c0_5] : memref<72x128xf32, #tpu.memory_space<vmem>>, vector<72x128xf32>
    tpu.vector_store %arg3[%c0_4, %c0_5], %21 {strides = array<i32>} : memref<72x128xf32, #tpu.memory_space<vmem>>, vector<72x128xf32>,
    return
  }
  func.func @transform_0(%arg0: i32) -> (i32, i32) {
    %c0_i32 = arith.constant 0 : i32
    %c0_i32_0 = arith.constant 0 : i32
    return %arg0, %c0_i32 : i32, i32
  }
  func.func @transform_1(%arg0: i32) -> (i32, i32) {
    %c0_i32 = arith.constant 0 : i32
    %c0_i32_0 = arith.constant 0 : i32
    %c0_i32_1 = arith.constant 0 : i32
    return %c0_i32, %c0_i32_0 : i32, i32
  }
  func.func @transform_2(%arg0: i32) -> (i32, i32) {
    %c0_i32 = arith.constant 0 : i32
    %c0_i32_0 = arith.constant 0 : i32
    return %arg0, %c0_i32 : i32, i32
  }
}

</mosaic_0001>

<llo_original>
// kernel: tpu_custom_call.1
$region0: #{tpu_custom_call.1}
  #allocation0 [shape = 'u32[]', space=smem, size = 0x4, offset = 0x4, fixed_abs, tag = 'smem constant byte address 0x4 - core index']
  #allocation1 [shape = 'u32[72,128]{1,0:T(1,128)}', space=vmem, size = 0x9000, scoped, tag = 'internal scratch']
  %s0 = inlined_call_operand.vmem [shape: bf16[72,16], index: 0, kind: input, shape index: {}]
  %s1 = inlined_call_operand.hbm [shape: bf16[16,768], index: 1, kind: input, shape index: {}]
  %s2 = inlined_call_operand.hbm [shape: f32[72,128], index: 2, kind: output, shape index: {}]
  %s3 = sld [smem:[#allocation0]]
  $region22: #{tpu_custom_call.1} parent=0
    _
  %s5 = ssub.s32 1, %s3
  %s6 = scalar_select 0, %s5, %s3
  $region1: #{tpu_custom_call.1} parent=0
    #allocation2 [shape = 'u8[24576]{0}', space=vmem, size = 0x6000, scoped, tag = 'input window, operand 1, single buffered']
    #allocation3 [shape = 's32[1]{0}', space=sflag, size = 0x4, scoped, tag = 'scoped memory for tpu_custom_call.1']
    #allocation4 [shape = 's32[1]{0}', space=sflag, size = 0x4, scoped, tag = 'scoped memory for tpu_custom_call.1']
    #allocation5 [shape = 'u8[36864]{0}', space=vmem, size = 0x9000, scoped, tag = 'output window, operand 0, single buffered']
    %7 = vsyncpa [#allocation3], 0
    %8 = vsyncpa [#allocation4], 0
    // Predicated region
    $region2: #{tpu_custom_call.1} parent=1 // pred_check
      _
    $region3: #{tpu_custom_call.1} parent=1 // pred_check_branch
      %10 = sbr.rel (0) target = $region5
    $region4: #{tpu_custom_call.1} parent=1 // pred_region
      _
    $region5: #{tpu_custom_call.1} parent=1 // pred_fallthru
      _
    // Predicated region
    $region6: #{tpu_custom_call.1} parent=1 // pred_check
      _
    $region7: #{tpu_custom_call.1} parent=1 // pred_check_branch
      %12 = sbr.rel (0) target = $region9
    $region8: #{tpu_custom_call.1} parent=1 // pred_region
      %14 = vsyncadd [#allocation3], 0
      %s15 = sshll.u32 %s1, 4
      %s16 = int_to_ptr.hbm [resolvable:$true] %s15
      %s17 = sshll.u32 [#allocation2], 4
      %s18 = int_to_ptr.vmem [resolvable:$true] %s17
      %23 = dma.hbm_to_vmem [thread:$0]  %s16, 768, %s18, [#allocation3], 384, 384, 24
    $region9: #{tpu_custom_call.1} parent=1 // pred_fallthru
      _
    // Predicated region
    $region10: #{tpu_custom_call.1} parent=1 // pred_check
      _
    $region11: #{tpu_custom_call.1} parent=1 // pred_check_branch
      %25 = sbr.rel (0) target = $region13
    $region12: #{tpu_custom_call.1} parent=1 // pred_region
      %27 = dma.done [#allocation3], 768
    $region13: #{tpu_custom_call.1} parent=1 // pred_fallthru
      _
    %v29 = vld [vmem:[%s0] sm:$0xf]
    %v30 = vld [vmem:[%s0 + $0x4] sm:$0xf]
    %v31 = vld [vmem:[%s0 + $0x8] sm:$0xf]
    %v32 = vld [vmem:[%s0 + $0xc] sm:$0xf]
    %v33 = vld [vmem:[%s0 + $0x10] sm:$0xf]
    %v34 = vld [vmem:[%s0 + $0x14] sm:$0xf]
    %v35 = vld [vmem:[%s0 + $0x18] sm:$0xf]
    %v36 = vld [vmem:[%s0 + $0x1c] sm:$0xf]
    %v37 = vld [vmem:[%s0 + $0x20] sm:$0xf]
    %v38 = vld [vmem:[#allocation2] sm:$0xff]
    %v39 = vld [vmem:[#allocation2 + $0x8] sm:$0xff]
    %v40 = vld [vmem:[#allocation2 + $0x10] sm:$0xff]
    %v41 = vld [vmem:[#allocation2 + $0x18] sm:$0xff]
    %v42 = vld [vmem:[#allocation2 + $0x20] sm:$0xff]
    %v43 = vld [vmem:[#allocation2 + $0x28] sm:$0xff]
    %v53 = vunpack.c.l.b16 %v29
    %v54 = vunpack.c.l.b16 %v30
    %v55 = vunpack.c.l.b16 %v31
    %v56 = vunpack.c.l.b16 %v32
    %v57 = vunpack.c.l.b16 %v33
    %v58 = vunpack.c.l.b16 %v34
    %v59 = vunpack.c.l.b16 %v35
    %v60 = vunpack.c.l.b16 %v36
    %v61 = vunpack.c.l.b16 %v37
    %v62 = vpack.c.b16 %v54, %v53
    %v63 = vpack.c.b16 %v56, %v55
    %v64 = vpack.c.b16 %v58, %v57
    %v65 = vpack.c.b16 %v60, %v59
    %v66 = vpack.c.b16 %v61, %v61
    %v73 = vunpack.c.l.b16 %v38
    %v74 = vunpack.c.h.b16 %v38
    %v75 = vunpack.c.l.b16 %v39
    %v76 = vunpack.c.h.b16 %v39
    %v77 = vunpack.c.l.b16 %v40
    %v78 = vunpack.c.h.b16 %v40
    %v79 = vunpack.c.l.b16 %v41
    %v80 = vunpack.c.h.b16 %v41
    %v81 = vunpack.c.l.b16 %v42
    %v82 = vunpack.c.h.b16 %v42
    %v83 = vunpack.c.l.b16 %v43
    %v84 = vunpack.c.h.b16 %v43
    %v85 = vpack.c.b16 %v79, %v73
    %v86 = vpack.c.b16 %v80, %v74
    %v87 = vpack.c.b16 %v81, %v75
    %v88 = vpack.c.b16 %v82, %v76
    %v89 = vpack.c.b16 %v83, %v77
    %v90 = vpack.c.b16 %v84, %v78
    %vm97 = vcmask 130048
    %v99 = vsel %vm97, %v62, 0
    %v102 = vsel %vm97, %v63, 0
    %v105 = vsel %vm97, %v64, 0
    %v108 = vsel %vm97, %v65, 0
    %v111 = vsel %vm97, %v66, 0
    %113 = vmatpush.bf16.msra.mxu0 0
    %114 = vmatpush.bf16.msra.mxu0 0
    %115 = vmatpush.bf16.msra.mxu0 0
    %116 = vmatpush.bf16.msra.mxu0 0
    %117 = vmatpush.bf16.msra.mxu0 0
    %118 = vmatpush.bf16.msra.mxu0 0
    %119 = vmatpush.bf16.msra.mxu0 0
    %120 = vmatpush.bf16.msra.mxu0 %v85
    %121 = vmatmul.bf16.gmra.mxu0 %v99
    %v122 = vpop.f32.mrf.mxu0
    %v123 = vadd.f32 0.0, %v122
    %v124 = vpop.f32.mrf.mxu0
    %v125 = vadd.f32 0.0, %v124
    %126 = vmatmul.bf16.gmra.mxu0 %v102
    %v127 = vpop.f32.mrf.mxu0
    %v128 = vadd.f32 0.0, %v127
    %v129 = vpop.f32.mrf.mxu0
    %v130 = vadd.f32 0.0, %v129
    %131 = vmatmul.bf16.gmra.mxu0 %v105
    %v132 = vpop.f32.mrf.mxu0
    %v133 = vadd.f32 0.0, %v132
    %v134 = vpop.f32.mrf.mxu0
    %v135 = vadd.f32 0.0, %v134
    %136 = vmatmul.bf16.gmra.mxu0 %v108
    %v137 = vpop.f32.mrf.mxu0
    %v138 = vadd.f32 0.0, %v137
    %v139 = vpop.f32.mrf.mxu0
    %v140 = vadd.f32 0.0, %v139
    %141 = vmatmul.bf16.gmra.mxu0 %v111
    %v142 = vpop.f32.mrf.mxu0
    %v143 = vadd.f32 0.0, %v142
    %v144 = vpop.f32.mrf.mxu0
    %145 = vdwg.mxu0
    %146 = vmatpush.bf16.msra.mxu0 0
    %147 = vmatpush.bf16.msra.mxu0 0
    %148 = vmatpush.bf16.msra.mxu0 0
    %149 = vmatpush.bf16.msra.mxu0 0
    %150 = vmatpush.bf16.msra.mxu0 0
    %151 = vmatpush.bf16.msra.mxu0 0
    %152 = vmatpush.bf16.msra.mxu0 0
    %153 = vmatpush.bf16.msra.mxu0 %v86
    %154 = vmatmul.bf16.gmra.mxu0 %v99
    %v155 = vpop.f32.mrf.mxu0
    %v156 = vadd.f32 0.0, %v155
    %v157 = vpop.f32.mrf.mxu0
    %v158 = vadd.f32 0.0, %v157
    %159 = vmatmul.bf16.gmra.mxu0 %v102
    %v160 = vpop.f32.mrf.mxu0
    %v161 = vadd.f32 0.0, %v160
    %v162 = vpop.f32.mrf.mxu0
    %v163 = vadd.f32 0.0, %v162
    %164 = vmatmul.bf16.gmra.mxu0 %v105
    %v165 = vpop.f32.mrf.mxu0
    %v166 = vadd.f32 0.0, %v165
    %v167 = vpop.f32.mrf.mxu0
    %v168 = vadd.f32 0.0, %v167
    %169 = vmatmul.bf16.gmra.mxu0 %v108
    %v170 = vpop.f32.mrf.mxu0
    %v171 = vadd.f32 0.0, %v170
    %v172 = vpop.f32.mrf.mxu0
    %v173 = vadd.f32 0.0, %v172
    %174 = vmatmul.bf16.gmra.mxu0 %v111
    %v175 = vpop.f32.mrf.mxu0
    %v176 = vadd.f32 0.0, %v175
    %v177 = vpop.f32.mrf.mxu0
    %178 = vdwg.mxu0
    %179 = vmatpush.bf16.msra.mxu0 0
    %180 = vmatpush.bf16.msra.mxu0 0
    %181 = vmatpush.bf16.msra.mxu0 0
    %182 = vmatpush.bf16.msra.mxu0 0
    %183 = vmatpush.bf16.msra.mxu0 0
    %184 = vmatpush.bf16.msra.mxu0 0
    %185 = vmatpush.bf16.msra.mxu0 0
    %186 = vmatpush.bf16.msra.mxu0 %v87
    %187 = vmatmul.bf16.gmra.mxu0 %v99
    %v188 = vpop.f32.mrf.mxu0
    %v189 = vadd.f32 0.0, %v188
    %v190 = vpop.f32.mrf.mxu0
    %v191 = vadd.f32 0.0, %v190
    %192 = vmatmul.bf16.gmra.mxu0 %v102
    %v193 = vpop.f32.mrf.mxu0
    %v194 = vadd.f32 0.0, %v193
    %v195 = vpop.f32.mrf.mxu0
    %v196 = vadd.f32 0.0, %v195
    %197 = vmatmul.bf16.gmra.mxu0 %v105
    %v198 = vpop.f32.mrf.mxu0
    %v199 = vadd.f32 0.0, %v198
    %v200 = vpop.f32.mrf.mxu0
    %v201 = vadd.f32 0.0, %v200
    %202 = vmatmul.bf16.gmra.mxu0 %v108
    %v203 = vpop.f32.mrf.mxu0
    %v204 = vadd.f32 0.0, %v203
    %v205 = vpop.f32.mrf.mxu0
    %v206 = vadd.f32 0.0, %v205
    %207 = vmatmul.bf16.gmra.mxu0 %v111
    %v208 = vpop.f32.mrf.mxu0
    %v209 = vadd.f32 0.0, %v208
    %v210 = vpop.f32.mrf.mxu0
    %211 = vdwg.mxu0
    %212 = vmatpush.bf16.msra.mxu0 0
    %213 = vmatpush.bf16.msra.mxu0 0
    %214 = vmatpush.bf16.msra.mxu0 0
    %215 = vmatpush.bf16.msra.mxu0 0
    %216 = vmatpush.bf16.msra.mxu0 0
    %217 = vmatpush.bf16.msra.mxu0 0
    %218 = vmatpush.bf16.msra.mxu0 0
    %219 = vmatpush.bf16.msra.mxu0 %v88
    %220 = vmatmul.bf16.gmra.mxu0 %v99
    %v221 = vpop.f32.mrf.mxu0
    %v222 = vadd.f32 0.0, %v221
    %v223 = vpop.f32.mrf.mxu0
    %v224 = vadd.f32 0.0, %v223
    %225 = vmatmul.bf16.gmra.mxu0 %v102
    %v226 = vpop.f32.mrf.mxu0
    %v227 = vadd.f32 0.0, %v226
    %v228 = vpop.f32.mrf.mxu0
    %v229 = vadd.f32 0.0, %v228
    %230 = vmatmul.bf16.gmra.mxu0 %v105
    %v231 = vpop.f32.mrf.mxu0
    %v232 = vadd.f32 0.0, %v231
    %v233 = vpop.f32.mrf.mxu0
    %v234 = vadd.f32 0.0, %v233
    %235 = vmatmul.bf16.gmra.mxu0 %v108
    %v236 = vpop.f32.mrf.mxu0
    %v237 = vadd.f32 0.0, %v236
    %v238 = vpop.f32.mrf.mxu0
    %v239 = vadd.f32 0.0, %v238
    %240 = vmatmul.bf16.gmra.mxu0 %v111
    %v241 = vpop.f32.mrf.mxu0
    %v242 = vadd.f32 0.0, %v241
    %v243 = vpop.f32.mrf.mxu0
    %244 = vdwg.mxu0
    %245 = vmatpush.bf16.msra.mxu0 0
    %246 = vmatpush.bf16.msra.mxu0 0
    %247 = vmatpush.bf16.msra.mxu0 0
    %248 = vmatpush.bf16.msra.mxu0 0
    %249 = vmatpush.bf16.msra.mxu0 0
    %250 = vmatpush.bf16.msra.mxu0 0
    %251 = vmatpush.bf16.msra.mxu0 0
    %252 = vmatpush.bf16.msra.mxu0 %v89
    %253 = vmatmul.bf16.gmra.mxu0 %v99
    %v254 = vpop.f32.mrf.mxu0
    %v255 = vadd.f32 0.0, %v254
    %v256 = vpop.f32.mrf.mxu0
    %v257 = vadd.f32 0.0, %v256
    %258 = vmatmul.bf16.gmra.mxu0 %v102
    %v259 = vpop.f32.mrf.mxu0
    %v260 = vadd.f32 0.0, %v259
    %v261 = vpop.f32.mrf.mxu0
    %v262 = vadd.f32 0.0, %v261
    %263 = vmatmul.bf16.gmra.mxu0 %v105
    %v264 = vpop.f32.mrf.mxu0
    %v265 = vadd.f32 0.0, %v264
    %v266 = vpop.f32.mrf.mxu0
    %v267 = vadd.f32 0.0, %v266
    %268 = vmatmul.bf16.gmra.mxu0 %v108
    %v269 = vpop.f32.mrf.mxu0
    %v270 = vadd.f32 0.0, %v269
    %v271 = vpop.f32.mrf.mxu0
    %v272 = vadd.f32 0.0, %v271
    %273 = vmatmul.bf16.gmra.mxu0 %v111
    %v274 = vpop.f32.mrf.mxu0
    %v275 = vadd.f32 0.0, %v274
    %v276 = vpop.f32.mrf.mxu0
    %277 = vdwg.mxu0
    %278 = vmatpush.bf16.msra.mxu0 0
    %279 = vmatpush.bf16.msra.mxu0 0
    %280 = vmatpush.bf16.msra.mxu0 0
    %281 = vmatpush.bf16.msra.mxu0 0
    %282 = vmatpush.bf16.msra.mxu0 0
    %283 = vmatpush.bf16.msra.mxu0 0
    %284 = vmatpush.bf16.msra.mxu0 0
    %285 = vmatpush.bf16.msra.mxu0 %v90
    %286 = vmatmul.bf16.gmra.mxu0 %v99
    %v287 = vpop.f32.mrf.mxu0
    %v288 = vadd.f32 0.0, %v287
    %v289 = vpop.f32.mrf.mxu0
    %v290 = vadd.f32 0.0, %v289
    %291 = vmatmul.bf16.gmra.mxu0 %v102
    %v292 = vpop.f32.mrf.mxu0
    %v293 = vadd.f32 0.0, %v292
    %v294 = vpop.f32.mrf.mxu0
    %v295 = vadd.f32 0.0, %v294
    %296 = vmatmul.bf16.gmra.mxu0 %v105
    %v297 = vpop.f32.mrf.mxu0
    %v298 = vadd.f32 0.0, %v297
    %v299 = vpop.f32.mrf.mxu0
    %v300 = vadd.f32 0.0, %v299
    %301 = vmatmul.bf16.gmra.mxu0 %v108
    %v302 = vpop.f32.mrf.mxu0
    %v303 = vadd.f32 0.0, %v302
    %v304 = vpop.f32.mrf.mxu0
    %v305 = vadd.f32 0.0, %v304
    %306 = vmatmul.bf16.gmra.mxu0 %v111
    %v307 = vpop.f32.mrf.mxu0
    %v308 = vadd.f32 0.0, %v307
    %v309 = vpop.f32.mrf.mxu0
    %310 = vdwg.mxu0
    %v311 = vmul.f32 %v123, %v123
    %v312 = vmul.f32 %v125, %v125
    %v313 = vmul.f32 %v128, %v128
    %v314 = vmul.f32 %v130, %v130
    %v315 = vmul.f32 %v133, %v133
    %v316 = vmul.f32 %v135, %v135
    %v317 = vmul.f32 %v138, %v138
    %v318 = vmul.f32 %v140, %v140
    %v319 = vmul.f32 %v143, %v143
    %v320 = vmul.f32 %v156, %v156
    %v321 = vmul.f32 %v158, %v158
    %v322 = vmul.f32 %v161, %v161
    %v323 = vmul.f32 %v163, %v163
    %v324 = vmul.f32 %v166, %v166
    %v325 = vmul.f32 %v168, %v168
    %v326 = vmul.f32 %v171, %v171
    %v327 = vmul.f32 %v173, %v173
    %v328 = vmul.f32 %v176, %v176
    %v329 = vadd.f32 %v311, %v320
    %v330 = vadd.f32 %v312, %v321
    %v331 = vadd.f32 %v313, %v322
    %v332 = vadd.f32 %v314, %v323
    %v333 = vadd.f32 %v315, %v324
    %v334 = vadd.f32 %v316, %v325
    %v335 = vadd.f32 %v317, %v326
    %v336 = vadd.f32 %v318, %v327
    %v337 = vadd.f32 %v319, %v328
    %v338 = vmul.f32 %v189, %v189
    %v339 = vmul.f32 %v191, %v191
    %v340 = vmul.f32 %v194, %v194
    %v341 = vmul.f32 %v196, %v196
    %v342 = vmul.f32 %v199, %v199
    %v343 = vmul.f32 %v201, %v201
    %v344 = vmul.f32 %v204, %v204
    %v345 = vmul.f32 %v206, %v206
    %v346 = vmul.f32 %v209, %v209
    %v347 = vadd.f32 %v329, %v338
    %v348 = vadd.f32 %v330, %v339
    %v349 = vadd.f32 %v331, %v340
    %v350 = vadd.f32 %v332, %v341
    %v351 = vadd.f32 %v333, %v342
    %v352 = vadd.f32 %v334, %v343
    %v353 = vadd.f32 %v335, %v344
    %v354 = vadd.f32 %v336, %v345
    %v355 = vadd.f32 %v337, %v346
    %v356 = vmul.f32 %v222, %v222
    %v357 = vmul.f32 %v224, %v224
    %v358 = vmul.f32 %v227, %v227
    %v359 = vmul.f32 %v229, %v229
    %v360 = vmul.f32 %v232, %v232
    %v361 = vmul.f32 %v234, %v234
    %v362 = vmul.f32 %v237, %v237
    %v363 = vmul.f32 %v239, %v239
    %v364 = vmul.f32 %v242, %v242
    %v365 = vadd.f32 %v347, %v356
    %v366 = vadd.f32 %v348, %v357
    %v367 = vadd.f32 %v349, %v358
    %v368 = vadd.f32 %v350, %v359
    %v369 = vadd.f32 %v351, %v360
    %v370 = vadd.f32 %v352, %v361
    %v371 = vadd.f32 %v353, %v362
    %v372 = vadd.f32 %v354, %v363
    %v373 = vadd.f32 %v355, %v364
    %v374 = vmul.f32 %v255, %v255
    %v375 = vmul.f32 %v257, %v257
    %v376 = vmul.f32 %v260, %v260
    %v377 = vmul.f32 %v262, %v262
    %v378 = vmul.f32 %v265, %v265
    %v379 = vmul.f32 %v267, %v267
    %v380 = vmul.f32 %v270, %v270
    %v381 = vmul.f32 %v272, %v272
    %v382 = vmul.f32 %v275, %v275
    %v383 = vadd.f32 %v365, %v374
    %v384 = vadd.f32 %v366, %v375
    %v385 = vadd.f32 %v367, %v376
    %v386 = vadd.f32 %v368, %v377
    %v387 = vadd.f32 %v369, %v378
    %v388 = vadd.f32 %v370, %v379
    %v389 = vadd.f32 %v371, %v380
    %v390 = vadd.f32 %v372, %v381
    %v391 = vadd.f32 %v373, %v382
    %v392 = vmul.f32 %v288, %v288
    %v393 = vmul.f32 %v290, %v290
    %v394 = vmul.f32 %v293, %v293
    %v395 = vmul.f32 %v295, %v295
    %v396 = vmul.f32 %v298, %v298
    %v397 = vmul.f32 %v300, %v300
    %v398 = vmul.f32 %v303, %v303
    %v399 = vmul.f32 %v305, %v305
    %v400 = vmul.f32 %v308, %v308
    %v401 = vadd.f32 %v383, %v392
    %v402 = vadd.f32 %v384, %v393
    %v403 = vadd.f32 %v385, %v394
    %v404 = vadd.f32 %v386, %v395
    %v405 = vadd.f32 %v387, %v396
    %v406 = vadd.f32 %v388, %v397
    %v407 = vadd.f32 %v389, %v398
    %v408 = vadd.f32 %v390, %v399
    %v409 = vadd.f32 %v391, %v400
    %v410 = vmul.f32 %v401, 0.33333334
    %v411 = vmul.f32 %v402, 0.33333334
    %v412 = vmul.f32 %v403, 0.33333334
    %v413 = vmul.f32 %v404, 0.33333334
    %v414 = vmul.f32 %v405, 0.33333334
    %v415 = vmul.f32 %v406, 0.33333334
    %v416 = vmul.f32 %v407, 0.33333334
    %v417 = vmul.f32 %v408, 0.33333334
    %v418 = vmul.f32 %v409, 0.33333334
    %419 = vst [vmem:[#allocation5] sm:$0xff] %v410
    %420 = vst [vmem:[#allocation5 + $0x8] sm:$0xff] %v411
    %421 = vst [vmem:[#allocation5 + $0x10] sm:$0xff] %v412
    %422 = vst [vmem:[#allocation5 + $0x18] sm:$0xff] %v413
    %423 = vst [vmem:[#allocation5 + $0x20] sm:$0xff] %v414
    %424 = vst [vmem:[#allocation5 + $0x28] sm:$0xff] %v415
    %425 = vst [vmem:[#allocation5 + $0x30] sm:$0xff] %v416
    %426 = vst [vmem:[#allocation5 + $0x38] sm:$0xff] %v417
    %427 = vst [vmem:[#allocation5 + $0x40] sm:$0xff] %v418
    // Predicated region
    $region14: #{tpu_custom_call.1} parent=1 // pred_check
      _
    $region15: #{tpu_custom_call.1} parent=1 // pred_check_branch
      %429 = sbr.rel (0) target = $region17
    $region16: #{tpu_custom_call.1} parent=1 // pred_region
      %431 = vsyncadd [#allocation4], 0
      %s432 = sshll.u32 [#allocation5], 4
      %s433 = int_to_ptr.vmem [resolvable:$true] %s432
      %s434 = sshll.u32 %s2, 4
      %s435 = int_to_ptr.hbm [resolvable:$true] %s434
      %440 = dma.vmem_to_hbm [thread:$0]  %s433, 1152, %s435, [#allocation4], 128, 128, 8
    $region17: #{tpu_custom_call.1} parent=1 // pred_fallthru
      _
    // Predicated region
    $region18: #{tpu_custom_call.1} parent=1 // pred_check
      _
    $region19: #{tpu_custom_call.1} parent=1 // pred_check_branch
      %442 = sbr.rel (0) target = $region21
    $region20: #{tpu_custom_call.1} parent=1 // pred_region
      %444 = dma.done [#allocation4], 1152
    $region21: #{tpu_custom_call.1} parent=1 // pred_fallthru
      _
    %445 = vsyncpa [#allocation3], 1
    %446 = vsyncpa [#allocation4], 1

</llo_original>
